<compile_context>
chip_gen: v7x
topology: tpu7x:2x2x1
jax: 0.10.0
libtpu: 0.0.40
codegen_flags: <defaults>
</compile_context>

<pallas_src>
import functools

import jax
import jax.numpy as jnp
from jax.experimental import pallas as pl
from jax.experimental.pallas import tpu as pltpu

_LANE = 128
_FLAT_COLS = 1024  # lane-dense slab width for the flattened view


def _pow_static(x, e):
    """x**e for a static non-negative integer e via square-and-multiply."""
    if e == 0:
        return jnp.ones_like(x)
    acc = None
    base = x
    while True:
        if e & 1:
            acc = base if acc is None else acc * base
        e >>= 1
        if e == 0:
            break
        base = base * base
    return acc


def _envelope_kernel(x_ref, o_ref, *, p, a, b, c):
    # Compute in f32 even for bf16/fp16 I/O (cancellation near x -> 1).
    x = x_ref[...].astype(jnp.float32)
    # EUP reciprocal seed (free VLIW slot) + one Newton-Raphson refinement:
    # rel error ~2^-24, a handful of VALU ops cheaper than the exact divide.
    r = pl.reciprocal(x, approx=True)
    inv_x = r * (2.0 - x * r)
    # a*x^(p-1) + b*x^p + c*x^(p+1) == x^(p-1) * (a + x*(b + c*x))   (Horner)
    poly = a + x * (b + c * x)
    x_pow_pm1 = _pow_static(x, p - 1)
    env = inv_x + x_pow_pm1 * poly
    env = jnp.where(x < 1.0, env, 0.0)
    # Out-of-bounds rows of a ragged final block hold garbage; correctness
    # relies on Pallas masking the output write-back, not on the where().
    o_ref[...] = env.astype(o_ref.dtype)


def _envelope_jnp(x, p, a, b, c):
    """Fused elementwise fallback for small inputs (XLA fuses this fully)."""
    xf = x.astype(jnp.float32)
    x_pow_p0 = xf ** (p - 1)
    x_pow_p1 = x_pow_p0 * xf
    x_pow_p2 = x_pow_p1 * xf
    out = 1.0 / xf + a * x_pow_p0 + b * x_pow_p1 + c * x_pow_p2
    return jnp.where(xf < 1.0, out, 0.0).astype(x.dtype)


def _vmem_capacity_bytes():
    try:
        info = pltpu.get_tpu_info()
        cap = getattr(info, "vmem_capacity_bytes", None)
        if cap:
            return int(cap)
    except Exception:
        pass
    return 64 << 20  # conservative default: v7x per-TensorCore VMEM


def _choose_block_rows(rows, cols, itemsize, vmem_cap):
    """Pick the row-block size for a (rows, cols) slab."""
    lane_cols = pl.cdiv(cols, _LANE) * _LANE
    # 2 pipeline buffers x (in + out) tiles live at once -> keep 4*tile within
    # ~1/4 of VMEM: v5e/v6e (128 MiB) -> 8 MiB tiles, v7x (64 MiB/TC) -> 4 MiB.
    tile_budget = max(1 << 21, min(8 << 20, vmem_cap // 16))
    br = max(1, tile_budget // (lane_cols * itemsize))
    # Keep >= ~8 grid steps so ("parallel",) shards across both v7x TCs and
    # per-step (~0.35us) overhead amortizes.
    if rows > 64:
        br = min(br, pl.cdiv(rows, 8))
    # Multiple of 32 rows satisfies the sublane-tile constraint for every
    # dtype down to int8/fp8 (f32 needs 8, bf16 needs 16).
    br = max(32, (br // 32) * 32)
    if br >= rows:
        return rows  # a single full-extent block is always legal
    return br


def envelope(x, exponent, *, min_pallas_elems=256 * 1024):
    """Apply the DimeNet Envelope elementwise. x: any shape, float dtype."""
    p = exponent + 1
    assert p >= 1, "exponent must be >= 0"
    a = -(p + 1) * (p + 2) / 2.0
    b = float(p * (p + 2))
    c = -p * (p + 1) / 2.0

    n = x.size
    if n == 0:
        return x
    # Small-input fast path: typical DimeNet edge arrays never reach Pallas.
    if n < min_pallas_elems:
        return _envelope_jnp(x, p, a, b, c)

    orig_shape = x.shape
    itemsize = jnp.dtype(x.dtype).itemsize
    vmem_cap = _vmem_capacity_bytes()

    pad = 0
    if n % _FLAT_COLS == 0:
        # Free (bitcast) reshape to a lane-dense 1024-wide slab.
        rows, cols = n // _FLAT_COLS, _FLAT_COLS
        x2d = x.reshape(rows, cols)
    elif x.ndim >= 2 and 128 <= x.shape[-1] <= 8192:
        # Keep the native last dim as the lane axis: the block's last dim
        # equals the full array dim, so no padding / extra HBM traffic.
        cols = x.shape[-1]
        rows = n // cols
        x2d = x.reshape(rows, cols)
    else:
        # Rare fallback (large ragged 1-D or tiny last dim): pad the flat view
        # up to the slab width.  Pad value 1.0 is harmless (masked to 0).
        cols = _FLAT_COLS
        padded_n = pl.cdiv(n, cols) * cols
        pad = padded_n - n
        flat = jnp.pad(x.reshape(-1), (0, pad), constant_values=1.0)
        rows = padded_n // cols
        x2d = flat.reshape(rows, cols)

    br = _choose_block_rows(rows, cols, itemsize, vmem_cap)
    grid = (pl.cdiv(rows, br),)
    lane_cols = pl.cdiv(cols, _LANE) * _LANE
    tile_bytes = br * lane_cols * itemsize
    vmem_limit = int(min(vmem_cap * 3 // 4,
                         max(32 << 20, 4 * tile_bytes + (8 << 20))))

    kernel = functools.partial(_envelope_kernel, p=p, a=a, b=b, c=c)
    cost = pl.CostEstimate(
        flops=14 * n,
        transcendentals=n,  # EUP reciprocal seed
        bytes_accessed=2 * n * itemsize,
    )

    out2d = pl.pallas_call(
        kernel,
        out_shape=jax.ShapeDtypeStruct((rows, cols), x.dtype),
        grid_spec=pltpu.PrefetchScalarGridSpec(
            num_scalar_prefetch=0,
            grid=grid,
            in_specs=[pl.BlockSpec((br, cols), lambda i: (i, 0))],
            out_specs=pl.BlockSpec((br, cols), lambda i: (i, 0)),
        ),
        compiler_params=pltpu.CompilerParams(
            dimension_semantics=("parallel",),
            vmem_limit_bytes=vmem_limit,
        ),
        cost_estimate=cost,
    )(x2d)

    if pad:
        return out2d.reshape(-1)[:n].reshape(orig_shape)
    return out2d.reshape(orig_shape)


def envelope_ref(x, exponent):
    """Pure-JAX reference matching the PyTorch module expression exactly."""
    p = exponent + 1
    a = -(p + 1) * (p + 2) / 2.0
    b = float(p * (p + 2))
    c = -p * (p + 1) / 2.0
    x_pow_p0 = x ** (p - 1)
    x_pow_p1 = x_pow_p0 * x
    x_pow_p2 = x_pow_p1 * x
    return (1.0 / x + a * x_pow_p0 + b * x_pow_p1 + c * x_pow_p2) * (
        x < 1.0).astype(x.dtype)


if __name__ == "__main__":
    exponent = 5  # DimeNet default envelope_exponent

    key = jax.random.PRNGKey(0)
    k1, k2, k3, k4, k5 = jax.random.split(key, 5)
    RTOL, ATOL = 1e-5, 1e-4

    def check(out, x, name, rtol=RTOL, atol=ATOL):
        ref = envelope_ref(x.astype(jnp.float32), exponent)
        assert out.shape == x.shape and out.dtype == x.dtype, name
        err = jnp.max(jnp.abs(out.astype(jnp.float32) - ref))
        assert jnp.allclose(out.astype(jnp.float32), ref, rtol=rtol,
                            atol=atol), f"{name}: max abs err = {err}"

    # 1) Typical DimeNet usage: small 1-D per-edge array -> fused-jnp fast path.
    x_edges = jax.random.uniform(k1, (2000,), jnp.float32, minval=0.05, maxval=1.2)
    check(jax.block_until_ready(envelope(x_edges, exponent)), x_edges, "fast-path")

    # 2) 2-D input whose flat length is NOT a multiple of 1024: Pallas path
    #    keeping the native last dim as the lane axis (no pad / slice), ragged
    #    final row-block masked by the grid.
    x_2d = jax.random.uniform(k2, (600, 1000), jnp.float32, minval=0.05, maxval=1.2)
    check(jax.block_until_ready(envelope(x_2d, exponent)), x_2d, "keep-lastdim")

    # 3) Flat-slab Pallas path (total divisible by 1024), forced past the
    #    small-input threshold to exercise the kernel at small shapes.
    x_flat = jax.random.uniform(k3, (48, 256), jnp.float32, minval=0.05, maxval=1.2)
    check(jax.block_until_ready(envelope(x_flat, exponent, min_pallas_elems=0)),
          x_flat, "flat-slab")

    # 4) Rare fallback: ragged 1-D length with no usable trailing dim.
    x_rag = jax.random.uniform(k4, (3000,), jnp.float32, minval=0.05, maxval=1.2)
    check(jax.block_until_ready(envelope(x_rag, exponent, min_pallas_elems=0)),
          x_rag, "pad-fallback")

    # 5) bf16 I/O: halved HBM traffic, f32 internal math inside the kernel.
    x_bf16 = jax.random.uniform(k5, (256, 512), jnp.float32,
                                minval=0.05, maxval=1.2).astype(jnp.bfloat16)
    check(jax.block_until_ready(envelope(x_bf16, exponent, min_pallas_elems=0)),
          x_bf16, "bf16", rtol=2e-2, atol=2e-2)

    print("KERNEL_OK")
</pallas_src>

<mosaic_0001>
module attributes {stable_mosaic.version = 11 : i64} {
  func.func @_envelope_kernel(%arg0: i32, %arg1: memref<64x1000xf32, #tpu.memory_space<vmem>>, %arg2: memref<64x1000xf32, #tpu.memory_space<vmem>>) attributes {dimension_semantics = [#tpu.dimension_semantics<parallel>], iteration_bounds = array<i64: 10>, scalar_prefetch = 0 : i64, scratch_operands = 0 : i64, tpu.core_type = #tpu.core_type<tc>, window_params = [{transform_indices = @transform_0, window_bounds = array<i64: 64, 1000>}, {transform_indices = @transform_1, window_bounds = array<i64: 64, 1000>}]} {
    %c0 = arith.constant 0 : index
    %c0_0 = arith.constant 0 : index
    %0 = vector.load %arg1[%c0, %c0_0] : memref<64x1000xf32, #tpu.memory_space<vmem>>, vector<64x1000xf32>
    %1 = tpu.reciprocal %0 {approx = true} : vector<64x1000xf32> -> vector<64x1000xf32>
    %2 = arith.mulf %0, %1 : vector<64x1000xf32>
    %cst = arith.constant 2.000000e+00 : f32
    %3 = vector.broadcast %cst : f32 to vector<64x1000xf32>
    %4 = arith.subf %3, %2 : vector<64x1000xf32>
    %5 = arith.mulf %1, %4 : vector<64x1000xf32>
    %cst_1 = arith.constant -2.100000e+01 : f32
    %6 = vector.broadcast %cst_1 : f32 to vector<64x1000xf32>
    %7 = arith.mulf %6, %0 : vector<64x1000xf32>
    %cst_2 = arith.constant 4.800000e+01 : f32
    %8 = vector.broadcast %cst_2 : f32 to vector<64x1000xf32>
    %9 = arith.addf %8, %7 : vector<64x1000xf32>
    %10 = arith.mulf %0, %9 : vector<64x1000xf32>
    %cst_3 = arith.constant -2.800000e+01 : f32
    %11 = vector.broadcast %cst_3 : f32 to vector<64x1000xf32>
    %12 = arith.addf %11, %10 : vector<64x1000xf32>
    %13 = arith.mulf %0, %0 : vector<64x1000xf32>
    %14 = arith.mulf %13, %13 : vector<64x1000xf32>
    %15 = arith.mulf %0, %14 : vector<64x1000xf32>
    %16 = arith.mulf %15, %12 : vector<64x1000xf32>
    %17 = arith.addf %5, %16 : vector<64x1000xf32>
    %cst_4 = arith.constant 1.000000e+00 : f32
    %18 = vector.broadcast %cst_4 : f32 to vector<64x1000xf32>
    %19 = arith.cmpf olt, %0, %18 : vector<64x1000xf32>
    %cst_5 = arith.constant 0.000000e+00 : f32
    %20 = vector.broadcast %cst_5 : f32 to vector<64x1000xf32>
    %21 = arith.select %19, %17, %20 : vector<64x1000xi1>, vector<64x1000xf32>
    %c0_6 = arith.constant 0 : index
    %c0_7 = arith.constant 0 : index
    %22 = vector.load %arg2[%c0_6, %c0_7] : memref<64x1000xf32, #tpu.memory_space<vmem>>, vector<64x1000xf32>
    tpu.vector_store %arg2[%c0_6, %c0_7], %21 {strides = array<i32>} : memref<64x1000xf32, #tpu.memory_space<vmem>>, vector<64x1000xf32>,
    return
  }
  func.func @transform_0(%arg0: i32) -> (i32, i32) {
    %c0_i32 = arith.constant 0 : i32
    %c0_i32_0 = arith.constant 0 : i32
    return %arg0, %c0_i32 : i32, i32
  }
  func.func @transform_1(%arg0: i32) -> (i32, i32) {
    %c0_i32 = arith.constant 0 : i32
    %c0_i32_0 = arith.constant 0 : i32
    return %arg0, %c0_i32 : i32, i32
  }
}

</mosaic_0001>

<llo_original>
// kernel: tpu_custom_call.1
$region0: #{tpu_custom_call.1}
  #allocation0 [shape = 'u32[]', space=smem, size = 0x4, offset = 0x4, fixed_abs, tag = 'smem constant byte address 0x4 - core index']
  #allocation1 [shape = 'u32[144,128]{1,0:T(1,128)}', space=vmem, size = 0x12000, scoped, tag = 'internal scratch']
  %s0 = inlined_call_operand.hbm [shape: f32[600,1000], index: 0, kind: input, shape index: {}]
  %s1 = inlined_call_operand.hbm [shape: f32[600,1000], index: 1, kind: output, shape index: {}]
  %s2 = sld [smem:[#allocation0]]
  $region41: #{tpu_custom_call.1} parent=0
    _
  %s4 = ssub.s32 1, %s2
  %s5 = scalar_select 0, %s4, %s2
  $region1: #{tpu_custom_call.1} parent=0
    #allocation2 [shape = 'u8[524288]{0}', space=vmem, size = 0x80000, scoped, tag = 'input window, operand 0']
    #allocation3 [shape = 's32[2]{0}', space=sflag, size = 0x8, scoped, tag = 'scoped memory for tpu_custom_call.1']
    #allocation4 [shape = 's32[2]{0}', space=sflag, size = 0x8, scoped, tag = 'scoped memory for tpu_custom_call.1']
    #allocation5 [shape = 'u8[524288]{0}', space=vmem, size = 0x80000, scoped, tag = 'output window, operand 0']
    %6 = vsyncpa [#allocation3], 0
    %s7 = scalar_lea.sflag [#allocation3], 1
    %8 = vsyncpa %s7, 0
    %9 = vsyncpa [#allocation4], 0
    %s10 = scalar_lea.sflag [#allocation4], 1
    %11 = vsyncpa %s10, 0
    loop: start=0, step=1, limit=12
    $region2: #{tpu_custom_call.1} parent=1 // loop_pre_header
      _
    $region3: #{tpu_custom_call.1} parent=1 // loop_header
      %s13 = sphi 0, %s17
      %p14 = scmp.ge.s32.totalorder %s13, 12
      %s23 = sphi 0, %s25
      %s26 = sphi 0, %s23
      %s27 = sphi 0, %s26
      %s43 = sphi 0, %s27
      %s49 = sphi 0, %s51
      %s52 = sphi 0, %s49
      %s53 = sphi 0, %s52
      %s69 = sphi 0, %s53
    $region4: #{tpu_custom_call.1} parent=1 // loop_header_branch
      %16 = sbr.rel (%p14) target = $region8
    $region5: #{tpu_custom_call.1} parent=1 // loop_body
      %s18 = ssub.s32 %s13, 1
      %s19 = ssub.s32 %s13, 2
      %s20 = sadd.s32 %s13, 1
      %s21 = ssub.s32 %s13, %s20
      %p22 = scmp.eq.s32.totalorder %s21, 0
      %s24 = sadd.s32 %s23, 1
      %s25 = scalar_select %p22, %s23, %s24
      %p28 = pneg %p22
      %p29 = scmp.eq.s32.totalorder %s13, 9
      %p30 = por %p28, %p29
      %p31 = scmp.ne.s32.totalorder %s23, %s26
      %p32 = scmp.eq.s32.totalorder %s13, 0
      %p33 = por %p31, %p32
      %p34 = scmp.ne.s32.totalorder %s23, %s26
      %p35 = scmp.eq.s32.totalorder %s18, 9
      %p36 = por %p34, %p35
      %p37 = scmp.ne.s32.totalorder %s26, %s27
      %p38 = scmp.eq.s32.totalorder %s18, 0
      %p39 = por %p37, %p38
      %p40 = scmp.ne.s32.totalorder %s26, %s27
      %p41 = scmp.eq.s32.totalorder %s19, 9
      %p42 = por %p40, %p41
      %p44 = scmp.ne.s32.totalorder %s27, %s43
      %p45 = scmp.eq.s32.totalorder %s19, 0
      %p46 = por %p44, %p45
      %s47 = ssub.s32 %s13, %s20
      %p48 = scmp.eq.s32.totalorder %s47, 0
      %s50 = sadd.s32 %s49, 1
      %s51 = scalar_select %p48, %s49, %s50
      %p54 = pneg %p48
      %p55 = scmp.eq.s32.totalorder %s13, 9
      %p56 = por %p54, %p55
      %p57 = scmp.ne.s32.totalorder %s49, %s52
      %p58 = scmp.eq.s32.totalorder %s13, 0
      %p59 = por %p57, %p58
      %p60 = scmp.ne.s32.totalorder %s49, %s52
      %p61 = scmp.eq.s32.totalorder %s18, 9
      %p62 = por %p60, %p61
      %p63 = scmp.ne.s32.totalorder %s52, %s53
      %p64 = scmp.eq.s32.totalorder %s18, 0
      %p65 = por %p63, %p64
      %p66 = scmp.ne.s32.totalorder %s52, %s53
      %p67 = scmp.eq.s32.totalorder %s19, 9
      %p68 = por %p66, %p67
      %p70 = scmp.ne.s32.totalorder %s53, %s69
      %p71 = scmp.eq.s32.totalorder %s19, 0
      %p72 = por %p70, %p71
      %p73 = scmp.le.s32.totalorder 1, %s13
      %p74 = scmp.lt.s32.totalorder %s13, 11
      %p75 = pnand %p73, %p74
      %p76 = pneg %p75
      // Predicated region
      $region9: #{tpu_custom_call.1} parent=5 // pred_check
        _
      $region10: #{tpu_custom_call.1} parent=5 // pred_check_branch
        %78 = sbr.rel (%p75) target = $region12
      $region11: #{tpu_custom_call.1} parent=5 // pred_region
        %s79 = ssub.s32 %s13, 1
      $region12: #{tpu_custom_call.1} parent=5 // pred_fallthru
        _
      %p80 = scmp.lt.s32.totalorder %s13, 10
      // Predicated region
      $region13: #{tpu_custom_call.1} parent=5 // pred_check
        %p81 = pneg %p80
      $region14: #{tpu_custom_call.1} parent=5 // pred_check_branch
        %83 = sbr.rel (%p81) target = $region16
      $region15: #{tpu_custom_call.1} parent=5 // pred_region
        // Predicated region
        $region17: #{tpu_custom_call.1} parent=15 // pred_check
          %p84 = pneg %p33
        $region18: #{tpu_custom_call.1} parent=15 // pred_check_branch
          %86 = sbr.rel (%p84) target = $region20
        $region19: #{tpu_custom_call.1} parent=15 // pred_region
          %s87 = sand.u32 %s23, 1
          %s88 = scalar_lea.sflag [#allocation3], %s87
          %s89 = sand.u32 %s23, 1
          %s90 = smul.addr %s89, 512
          %s91 = scalar_lea.vmem [#allocation2], %s90
          %s92 = smul.u32 8, %s13
          %s93 = ssub.s32 75, %s92
          %p94 = scmp.lt.s32.totalorder %s93, 8
          %s95 = scalar_select %p94, %s93, 8
          %s96 = smul.u32 128, %s95
          %s97 = smul.u32 %s96, 8
          %s99 = ssub.s32 8192, %s97
          %100 = vsyncadd %s88, %s99
          %p101 = scmp.ne.s32.totalorder 0, %s97
          %s102 = smul.addr %s92, 8
          %s103 = smul.addr %s102, 128
          %s104 = scalar_lea.hbm %s0, %s103
          %s105 = smul.u32 64, %s95
          %s106 = sshll.u32 %s91, 4
          %s107 = int_to_ptr.vmem [resolvable:$true] %s106
          %s108 = sshll.u32 %s105, 4
          %112 = dma.hbm_to_vmem [thread:$0]  (%p101), %s104, %s108, %s107, %s88, 1024, 1024, 64
        $region20: #{tpu_custom_call.1} parent=15 // pred_fallthru
          _
      $region16: #{tpu_custom_call.1} parent=5 // pred_fallthru
        _
      %p113 = scmp.le.s32.totalorder 1, %s13
      %p114 = scmp.lt.s32.totalorder %s13, 11
      %p115 = pnand %p113, %p114
      %p116 = pneg %p115
      // Predicated region
      $region21: #{tpu_custom_call.1} parent=5 // pred_check
        _
      $region22: #{tpu_custom_call.1} parent=5 // pred_check_branch
        %118 = sbr.rel (%p115) target = $region24
      $region23: #{tpu_custom_call.1} parent=5 // pred_region
        %s119 = ssub.s32 %s13, 1
        %s120 = sand.u32 %s26, 1
        %s121 = scalar_lea.sflag [#allocation3], %s120
        %s122 = sand.u32 %s26, 1
        %s123 = smul.addr %s122, 512
        %s124 = scalar_lea.vmem [#allocation2], %s123
        // Predicated region
        $region25: #{tpu_custom_call.1} parent=23 // pred_check
          %p125 = pneg %p39
        $region26: #{tpu_custom_call.1} parent=23 // pred_check_branch
          %127 = sbr.rel (%p125) target = $region28
        $region27: #{tpu_custom_call.1} parent=23 // pred_region
          %128 = dma.done %s121, 8192
        $region28: #{tpu_custom_call.1} parent=23 // pred_fallthru
          _
        %s129 = sand.u32 %s26, 1
        %s130 = scalar_lea.sflag [#allocation3], %s129
        %s131 = sand.u32 %s26, 1
        %s132 = smul.addr %s131, 512
        %s133 = scalar_lea.vmem [#allocation2], %s132
        %p134 = pneg %p39
        %p135 = pneg %p36
        %p136 = pneg %p65
        %p137 = pneg %p62
        %s138 = sand.u32 %s52, 1
        %s139 = scalar_lea.sflag [#allocation4], %s138
        %s140 = sand.u32 %s52, 1
        %s141 = smul.addr %s140, 512
        %s142 = scalar_lea.vmem [#allocation5], %s141
        %s143 = smul.u32 8, %s18
        %s144 = ssub.s32 75, %s143
        %p145 = scmp.lt.s32.totalorder %s144, 8
        %s146 = scalar_select %p145, %s144, 8
        %s147 = smul.u32 128, %s146
        %s148 = smul.u32 %s147, 8
        %s149 = smul.u32 8, %s18
        %s150 = ssub.s32 75, %s149
        %p151 = scmp.lt.s32.totalorder %s150, 8
        %s152 = scalar_select %p151, %s150, 8
        %s153 = smul.u32 128, %s152
        %s154 = smul.u32 %s153, 8
        %v155 = vld [vmem:[%s124] sm:$0xff]
        %v156 = vld [vmem:[%s124 + $0x8] sm:$0xff]
        %v157 = vld [vmem:[%s124 + $0x10] sm:$0xff]
        %v158 = vld [vmem:[%s124 + $0x18] sm:$0xff]
        %v159 = vld [vmem:[%s124 + $0x20] sm:$0xff]
        %v160 = vld [vmem:[%s124 + $0x28] sm:$0xff]
        %v161 = vld [vmem:[%s124 + $0x30] sm:$0xff]
        %v162 = vld [vmem:[%s124 + $0x38] sm:$0xff]
        %v163 = vld [vmem:[%s124 + $0x40] sm:$0xff]
        %v164 = vld [vmem:[%s124 + $0x48] sm:$0xff]
        %v165 = vld [vmem:[%s124 + $0x50] sm:$0xff]
        %v166 = vld [vmem:[%s124 + $0x58] sm:$0xff]
        %v167 = vld [vmem:[%s124 + $0x60] sm:$0xff]
        %v168 = vld [vmem:[%s124 + $0x68] sm:$0xff]
        %v169 = vld [vmem:[%s124 + $0x70] sm:$0xff]
        %v170 = vld [vmem:[%s124 + $0x78] sm:$0xff]
        %v171 = vld [vmem:[%s124 + $0x80] sm:$0xff]
        %v172 = vld [vmem:[%s124 + $0x88] sm:$0xff]
        %v173 = vld [vmem:[%s124 + $0x90] sm:$0xff]
        %v174 = vld [vmem:[%s124 + $0x98] sm:$0xff]
        %v175 = vld [vmem:[%s124 + $0xa0] sm:$0xff]
        %v176 = vld [vmem:[%s124 + $0xa8] sm:$0xff]
        %v177 = vld [vmem:[%s124 + $0xb0] sm:$0xff]
        %v178 = vld [vmem:[%s124 + $0xb8] sm:$0xff]
        %v179 = vld [vmem:[%s124 + $0xc0] sm:$0xff]
        %v180 = vld [vmem:[%s124 + $0xc8] sm:$0xff]
        %v181 = vld [vmem:[%s124 + $0xd0] sm:$0xff]
        %v182 = vld [vmem:[%s124 + $0xd8] sm:$0xff]
        %v183 = vld [vmem:[%s124 + $0xe0] sm:$0xff]
        %v184 = vld [vmem:[%s124 + $0xe8] sm:$0xff]
        %v185 = vld [vmem:[%s124 + $0xf0] sm:$0xff]
        %v186 = vld [vmem:[%s124 + $0xf8] sm:$0xff]
        %v187 = vld [vmem:[%s124 + $0x100] sm:$0xff]
        %v188 = vld [vmem:[%s124 + $0x108] sm:$0xff]
        %v189 = vld [vmem:[%s124 + $0x110] sm:$0xff]
        %v190 = vld [vmem:[%s124 + $0x118] sm:$0xff]
        %v191 = vld [vmem:[%s124 + $0x120] sm:$0xff]
        %v192 = vld [vmem:[%s124 + $0x128] sm:$0xff]
        %v193 = vld [vmem:[%s124 + $0x130] sm:$0xff]
        %v194 = vld [vmem:[%s124 + $0x138] sm:$0xff]
        %v195 = vld [vmem:[%s124 + $0x140] sm:$0xff]
        %v196 = vld [vmem:[%s124 + $0x148] sm:$0xff]
        %v197 = vld [vmem:[%s124 + $0x150] sm:$0xff]
        %v198 = vld [vmem:[%s124 + $0x158] sm:$0xff]
        %v199 = vld [vmem:[%s124 + $0x160] sm:$0xff]
        %v200 = vld [vmem:[%s124 + $0x168] sm:$0xff]
        %v201 = vld [vmem:[%s124 + $0x170] sm:$0xff]
        %v202 = vld [vmem:[%s124 + $0x178] sm:$0xff]
        %v203 = vld [vmem:[%s124 + $0x180] sm:$0xff]
        %v204 = vld [vmem:[%s124 + $0x188] sm:$0xff]
        %v205 = vld [vmem:[%s124 + $0x190] sm:$0xff]
        %v206 = vld [vmem:[%s124 + $0x198] sm:$0xff]
        %v207 = vld [vmem:[%s124 + $0x1a0] sm:$0xff]
        %v208 = vld [vmem:[%s124 + $0x1a8] sm:$0xff]
        %v209 = vld [vmem:[%s124 + $0x1b0] sm:$0xff]
        %v210 = vld [vmem:[%s124 + $0x1b8] sm:$0xff]
        %v211 = vld [vmem:[%s124 + $0x1c0] sm:$0xff]
        %v212 = vld [vmem:[%s124 + $0x1c8] sm:$0xff]
        %v213 = vld [vmem:[%s124 + $0x1d0] sm:$0xff]
        %v214 = vld [vmem:[%s124 + $0x1d8] sm:$0xff]
        %v215 = vld [vmem:[%s124 + $0x1e0] sm:$0xff]
        %v216 = vld [vmem:[%s124 + $0x1e8] sm:$0xff]
        %v217 = vld [vmem:[%s124 + $0x1f0] sm:$0xff]
        %v218 = vld [vmem:[%s124 + $0x1f8] sm:$0xff]
        %v219 = vrcp.pop %v155
        %v220 = vrcp.pop %v156
        %v221 = vrcp.pop %v157
        %v222 = vrcp.pop %v158
        %v223 = vrcp.pop %v159
        %v224 = vrcp.pop %v160
        %v225 = vrcp.pop %v161
        %v226 = vrcp.pop %v162
        %v227 = vrcp.pop %v163
        %v228 = vrcp.pop %v164
        %v229 = vrcp.pop %v165
        %v230 = vrcp.pop %v166
        %v231 = vrcp.pop %v167
        %v232 = vrcp.pop %v168
        %v233 = vrcp.pop %v169
        %v234 = vrcp.pop %v170
        %v235 = vrcp.pop %v171
        %v236 = vrcp.pop %v172
        %v237 = vrcp.pop %v173
        %v238 = vrcp.pop %v174
        %v239 = vrcp.pop %v175
        %v240 = vrcp.pop %v176
        %v241 = vrcp.pop %v177
        %v242 = vrcp.pop %v178
        %v243 = vrcp.pop %v179
        %v244 = vrcp.pop %v180
        %v245 = vrcp.pop %v181
        %v246 = vrcp.pop %v182
        %v247 = vrcp.pop %v183
        %v248 = vrcp.pop %v184
        %v249 = vrcp.pop %v185
        %v250 = vrcp.pop %v186
        %v251 = vrcp.pop %v187
        %v252 = vrcp.pop %v188
        %v253 = vrcp.pop %v189
        %v254 = vrcp.pop %v190
        %v255 = vrcp.pop %v191
        %v256 = vrcp.pop %v192
        %v257 = vrcp.pop %v193
        %v258 = vrcp.pop %v194
        %v259 = vrcp.pop %v195
        %v260 = vrcp.pop %v196
        %v261 = vrcp.pop %v197
        %v262 = vrcp.pop %v198
        %v263 = vrcp.pop %v199
        %v264 = vrcp.pop %v200
        %v265 = vrcp.pop %v201
        %v266 = vrcp.pop %v202
        %v267 = vrcp.pop %v203
        %v268 = vrcp.pop %v204
        %v269 = vrcp.pop %v205
        %v270 = vrcp.pop %v206
        %v271 = vrcp.pop %v207
        %v272 = vrcp.pop %v208
        %v273 = vrcp.pop %v209
        %v274 = vrcp.pop %v210
        %v275 = vrcp.pop %v211
        %v276 = vrcp.pop %v212
        %v277 = vrcp.pop %v213
        %v278 = vrcp.pop %v214
        %v279 = vrcp.pop %v215
        %v280 = vrcp.pop %v216
        %v281 = vrcp.pop %v217
        %v282 = vrcp.pop %v218
        %v283 = vmul.f32 %v155, %v219
        %v284 = vmul.f32 %v156, %v220
        %v285 = vmul.f32 %v157, %v221
        %v286 = vmul.f32 %v158, %v222
        %v287 = vmul.f32 %v159, %v223
        %v288 = vmul.f32 %v160, %v224
        %v289 = vmul.f32 %v161, %v225
        %v290 = vmul.f32 %v162, %v226
        %v291 = vmul.f32 %v163, %v227
        %v292 = vmul.f32 %v164, %v228
        %v293 = vmul.f32 %v165, %v229
        %v294 = vmul.f32 %v166, %v230
        %v295 = vmul.f32 %v167, %v231
        %v296 = vmul.f32 %v168, %v232
        %v297 = vmul.f32 %v169, %v233
        %v298 = vmul.f32 %v170, %v234
        %v299 = vmul.f32 %v171, %v235
        %v300 = vmul.f32 %v172, %v236
        %v301 = vmul.f32 %v173, %v237
        %v302 = vmul.f32 %v174, %v238
        %v303 = vmul.f32 %v175, %v239
        %v304 = vmul.f32 %v176, %v240
        %v305 = vmul.f32 %v177, %v241
        %v306 = vmul.f32 %v178, %v242
        %v307 = vmul.f32 %v179, %v243
        %v308 = vmul.f32 %v180, %v244
        %v309 = vmul.f32 %v181, %v245
        %v310 = vmul.f32 %v182, %v246
        %v311 = vmul.f32 %v183, %v247
        %v312 = vmul.f32 %v184, %v248
        %v313 = vmul.f32 %v185, %v249
        %v314 = vmul.f32 %v186, %v250
        %v315 = vmul.f32 %v187, %v251
        %v316 = vmul.f32 %v188, %v252
        %v317 = vmul.f32 %v189, %v253
        %v318 = vmul.f32 %v190, %v254
        %v319 = vmul.f32 %v191, %v255
        %v320 = vmul.f32 %v192, %v256
        %v321 = vmul.f32 %v193, %v257
        %v322 = vmul.f32 %v194, %v258
        %v323 = vmul.f32 %v195, %v259
        %v324 = vmul.f32 %v196, %v260
        %v325 = vmul.f32 %v197, %v261
        %v326 = vmul.f32 %v198, %v262
        %v327 = vmul.f32 %v199, %v263
        %v328 = vmul.f32 %v200, %v264
        %v329 = vmul.f32 %v201, %v265
        %v330 = vmul.f32 %v202, %v266
        %v331 = vmul.f32 %v203, %v267
        %v332 = vmul.f32 %v204, %v268
        %v333 = vmul.f32 %v205, %v269
        %v334 = vmul.f32 %v206, %v270
        %v335 = vmul.f32 %v207, %v271
        %v336 = vmul.f32 %v208, %v272
        %v337 = vmul.f32 %v209, %v273
        %v338 = vmul.f32 %v210, %v274
        %v339 = vmul.f32 %v211, %v275
        %v340 = vmul.f32 %v212, %v276
        %v341 = vmul.f32 %v213, %v277
        %v342 = vmul.f32 %v214, %v278
        %v343 = vmul.f32 %v215, %v279
        %v344 = vmul.f32 %v216, %v280
        %v345 = vmul.f32 %v217, %v281
        %v346 = vmul.f32 %v218, %v282
        %v347 = vsub.f32 2.0, %v283
        %v348 = vsub.f32 2.0, %v284
        %v349 = vsub.f32 2.0, %v285
        %v350 = vsub.f32 2.0, %v286
        %v351 = vsub.f32 2.0, %v287
        %v352 = vsub.f32 2.0, %v288
        %v353 = vsub.f32 2.0, %v289
        %v354 = vsub.f32 2.0, %v290
        %v355 = vsub.f32 2.0, %v291
        %v356 = vsub.f32 2.0, %v292
        %v357 = vsub.f32 2.0, %v293
        %v358 = vsub.f32 2.0, %v294
        %v359 = vsub.f32 2.0, %v295
        %v360 = vsub.f32 2.0, %v296
        %v361 = vsub.f32 2.0, %v297
        %v362 = vsub.f32 2.0, %v298
        %v363 = vsub.f32 2.0, %v299
        %v364 = vsub.f32 2.0, %v300
        %v365 = vsub.f32 2.0, %v301
        %v366 = vsub.f32 2.0, %v302
        %v367 = vsub.f32 2.0, %v303
        %v368 = vsub.f32 2.0, %v304
        %v369 = vsub.f32 2.0, %v305
        %v370 = vsub.f32 2.0, %v306
        %v371 = vsub.f32 2.0, %v307
        %v372 = vsub.f32 2.0, %v308
        %v373 = vsub.f32 2.0, %v309
        %v374 = vsub.f32 2.0, %v310
        %v375 = vsub.f32 2.0, %v311
        %v376 = vsub.f32 2.0, %v312
        %v377 = vsub.f32 2.0, %v313
        %v378 = vsub.f32 2.0, %v314
        %v379 = vsub.f32 2.0, %v315
        %v380 = vsub.f32 2.0, %v316
        %v381 = vsub.f32 2.0, %v317
        %v382 = vsub.f32 2.0, %v318
        %v383 = vsub.f32 2.0, %v319
        %v384 = vsub.f32 2.0, %v320
        %v385 = vsub.f32 2.0, %v321
        %v386 = vsub.f32 2.0, %v322
        %v387 = vsub.f32 2.0, %v323
        %v388 = vsub.f32 2.0, %v324
        %v389 = vsub.f32 2.0, %v325
        %v390 = vsub.f32 2.0, %v326
        %v391 = vsub.f32 2.0, %v327
        %v392 = vsub.f32 2.0, %v328
        %v393 = vsub.f32 2.0, %v329
        %v394 = vsub.f32 2.0, %v330
        %v395 = vsub.f32 2.0, %v331
        %v396 = vsub.f32 2.0, %v332
        %v397 = vsub.f32 2.0, %v333
        %v398 = vsub.f32 2.0, %v334
        %v399 = vsub.f32 2.0, %v335
        %v400 = vsub.f32 2.0, %v336
        %v401 = vsub.f32 2.0, %v337
        %v402 = vsub.f32 2.0, %v338
        %v403 = vsub.f32 2.0, %v339
        %v404 = vsub.f32 2.0, %v340
        %v405 = vsub.f32 2.0, %v341
        %v406 = vsub.f32 2.0, %v342
        %v407 = vsub.f32 2.0, %v343
        %v408 = vsub.f32 2.0, %v344
        %v409 = vsub.f32 2.0, %v345
        %v410 = vsub.f32 2.0, %v346
        %v411 = vmul.f32 %v219, %v347
        %v412 = vmul.f32 %v220, %v348
        %v413 = vmul.f32 %v221, %v349
        %v414 = vmul.f32 %v222, %v350
        %v415 = vmul.f32 %v223, %v351
        %v416 = vmul.f32 %v224, %v352
        %v417 = vmul.f32 %v225, %v353
        %v418 = vmul.f32 %v226, %v354
        %v419 = vmul.f32 %v227, %v355
        %v420 = vmul.f32 %v228, %v356
        %v421 = vmul.f32 %v229, %v357
        %v422 = vmul.f32 %v230, %v358
        %v423 = vmul.f32 %v231, %v359
        %v424 = vmul.f32 %v232, %v360
        %v425 = vmul.f32 %v233, %v361
        %v426 = vmul.f32 %v234, %v362
        %v427 = vmul.f32 %v235, %v363
        %v428 = vmul.f32 %v236, %v364
        %v429 = vmul.f32 %v237, %v365
        %v430 = vmul.f32 %v238, %v366
        %v431 = vmul.f32 %v239, %v367
        %v432 = vmul.f32 %v240, %v368
        %v433 = vmul.f32 %v241, %v369
        %v434 = vmul.f32 %v242, %v370
        %v435 = vmul.f32 %v243, %v371
        %v436 = vmul.f32 %v244, %v372
        %v437 = vmul.f32 %v245, %v373
        %v438 = vmul.f32 %v246, %v374
        %v439 = vmul.f32 %v247, %v375
        %v440 = vmul.f32 %v248, %v376
        %v441 = vmul.f32 %v249, %v377
        %v442 = vmul.f32 %v250, %v378
        %v443 = vmul.f32 %v251, %v379
        %v444 = vmul.f32 %v252, %v380
        %v445 = vmul.f32 %v253, %v381
        %v446 = vmul.f32 %v254, %v382
        %v447 = vmul.f32 %v255, %v383
        %v448 = vmul.f32 %v256, %v384
        %v449 = vmul.f32 %v257, %v385
        %v450 = vmul.f32 %v258, %v386
        %v451 = vmul.f32 %v259, %v387
        %v452 = vmul.f32 %v260, %v388
        %v453 = vmul.f32 %v261, %v389
        %v454 = vmul.f32 %v262, %v390
        %v455 = vmul.f32 %v263, %v391
        %v456 = vmul.f32 %v264, %v392
        %v457 = vmul.f32 %v265, %v393
        %v458 = vmul.f32 %v266, %v394
        %v459 = vmul.f32 %v267, %v395
        %v460 = vmul.f32 %v268, %v396
        %v461 = vmul.f32 %v269, %v397
        %v462 = vmul.f32 %v270, %v398
        %v463 = vmul.f32 %v271, %v399
        %v464 = vmul.f32 %v272, %v400
        %v465 = vmul.f32 %v273, %v401
        %v466 = vmul.f32 %v274, %v402
        %v467 = vmul.f32 %v275, %v403
        %v468 = vmul.f32 %v276, %v404
        %v469 = vmul.f32 %v277, %v405
        %v470 = vmul.f32 %v278, %v406
        %v471 = vmul.f32 %v279, %v407
        %v472 = vmul.f32 %v280, %v408
        %v473 = vmul.f32 %v281, %v409
        %v474 = vmul.f32 %v282, %v410
        %v475 = vmul.f32 %v155, -21.0
        %v476 = vmul.f32 %v156, -21.0
        %v477 = vmul.f32 %v157, -21.0
        %v478 = vmul.f32 %v158, -21.0
        %v479 = vmul.f32 %v159, -21.0
        %v480 = vmul.f32 %v160, -21.0
        %v481 = vmul.f32 %v161, -21.0
        %v482 = vmul.f32 %v162, -21.0
        %v483 = vmul.f32 %v163, -21.0
        %v484 = vmul.f32 %v164, -21.0
        %v485 = vmul.f32 %v165, -21.0
        %v486 = vmul.f32 %v166, -21.0
        %v487 = vmul.f32 %v167, -21.0
        %v488 = vmul.f32 %v168, -21.0
        %v489 = vmul.f32 %v169, -21.0
        %v490 = vmul.f32 %v170, -21.0
        %v491 = vmul.f32 %v171, -21.0
        %v492 = vmul.f32 %v172, -21.0
        %v493 = vmul.f32 %v173, -21.0
        %v494 = vmul.f32 %v174, -21.0
        %v495 = vmul.f32 %v175, -21.0
        %v496 = vmul.f32 %v176, -21.0
        %v497 = vmul.f32 %v177, -21.0
        %v498 = vmul.f32 %v178, -21.0
        %v499 = vmul.f32 %v179, -21.0
        %v500 = vmul.f32 %v180, -21.0
        %v501 = vmul.f32 %v181, -21.0
        %v502 = vmul.f32 %v182, -21.0
        %v503 = vmul.f32 %v183, -21.0
        %v504 = vmul.f32 %v184, -21.0
        %v505 = vmul.f32 %v185, -21.0
        %v506 = vmul.f32 %v186, -21.0
        %v507 = vmul.f32 %v187, -21.0
        %v508 = vmul.f32 %v188, -21.0
        %v509 = vmul.f32 %v189, -21.0
        %v510 = vmul.f32 %v190, -21.0
        %v511 = vmul.f32 %v191, -21.0
        %v512 = vmul.f32 %v192, -21.0
        %v513 = vmul.f32 %v193, -21.0
        %v514 = vmul.f32 %v194, -21.0
        %v515 = vmul.f32 %v195, -21.0
        %v516 = vmul.f32 %v196, -21.0
        %v517 = vmul.f32 %v197, -21.0
        %v518 = vmul.f32 %v198, -21.0
        %v519 = vmul.f32 %v199, -21.0
        %v520 = vmul.f32 %v200, -21.0
        %v521 = vmul.f32 %v201, -21.0
        %v522 = vmul.f32 %v202, -21.0
        %v523 = vmul.f32 %v203, -21.0
        %v524 = vmul.f32 %v204, -21.0
        %v525 = vmul.f32 %v205, -21.0
        %v526 = vmul.f32 %v206, -21.0
        %v527 = vmul.f32 %v207, -21.0
        %v528 = vmul.f32 %v208, -21.0
        %v529 = vmul.f32 %v209, -21.0
        %v530 = vmul.f32 %v210, -21.0
        %v531 = vmul.f32 %v211, -21.0
        %v532 = vmul.f32 %v212, -21.0
        %v533 = vmul.f32 %v213, -21.0
        %v534 = vmul.f32 %v214, -21.0
        %v535 = vmul.f32 %v215, -21.0
        %v536 = vmul.f32 %v216, -21.0
        %v537 = vmul.f32 %v217, -21.0
        %v538 = vmul.f32 %v218, -21.0
        %v539 = vadd.f32 %v475, 48.0
        %v540 = vadd.f32 %v476, 48.0
        %v541 = vadd.f32 %v477, 48.0
        %v542 = vadd.f32 %v478, 48.0
        %v543 = vadd.f32 %v479, 48.0
        %v544 = vadd.f32 %v480, 48.0
        %v545 = vadd.f32 %v481, 48.0
        %v546 = vadd.f32 %v482, 48.0
        %v547 = vadd.f32 %v483, 48.0
        %v548 = vadd.f32 %v484, 48.0
        %v549 = vadd.f32 %v485, 48.0
        %v550 = vadd.f32 %v486, 48.0
        %v551 = vadd.f32 %v487, 48.0
        %v552 = vadd.f32 %v488, 48.0
        %v553 = vadd.f32 %v489, 48.0
        %v554 = vadd.f32 %v490, 48.0
        %v555 = vadd.f32 %v491, 48.0
        %v556 = vadd.f32 %v492, 48.0
        %v557 = vadd.f32 %v493, 48.0
        %v558 = vadd.f32 %v494, 48.0
        %v559 = vadd.f32 %v495, 48.0
        %v560 = vadd.f32 %v496, 48.0
        %v561 = vadd.f32 %v497, 48.0
        %v562 = vadd.f32 %v498, 48.0
        %v563 = vadd.f32 %v499, 48.0
        %v564 = vadd.f32 %v500, 48.0
        %v565 = vadd.f32 %v501, 48.0
        %v566 = vadd.f32 %v502, 48.0
        %v567 = vadd.f32 %v503, 48.0
        %v568 = vadd.f32 %v504, 48.0
        %v569 = vadd.f32 %v505, 48.0
        %v570 = vadd.f32 %v506, 48.0
        %v571 = vadd.f32 %v507, 48.0
        %v572 = vadd.f32 %v508, 48.0
        %v573 = vadd.f32 %v509, 48.0
        %v574 = vadd.f32 %v510, 48.0
        %v575 = vadd.f32 %v511, 48.0
        %v576 = vadd.f32 %v512, 48.0
        %v577 = vadd.f32 %v513, 48.0
        %v578 = vadd.f32 %v514, 48.0
        %v579 = vadd.f32 %v515, 48.0
        %v580 = vadd.f32 %v516, 48.0
        %v581 = vadd.f32 %v517, 48.0
        %v582 = vadd.f32 %v518, 48.0
        %v583 = vadd.f32 %v519, 48.0
        %v584 = vadd.f32 %v520, 48.0
        %v585 = vadd.f32 %v521, 48.0
        %v586 = vadd.f32 %v522, 48.0
        %v587 = vadd.f32 %v523, 48.0
        %v588 = vadd.f32 %v524, 48.0
        %v589 = vadd.f32 %v525, 48.0
        %v590 = vadd.f32 %v526, 48.0
        %v591 = vadd.f32 %v527, 48.0
        %v592 = vadd.f32 %v528, 48.0
        %v593 = vadd.f32 %v529, 48.0
        %v594 = vadd.f32 %v530, 48.0
        %v595 = vadd.f32 %v531, 48.0
        %v596 = vadd.f32 %v532, 48.0
        %v597 = vadd.f32 %v533, 48.0
        %v598 = vadd.f32 %v534, 48.0
        %v599 = vadd.f32 %v535, 48.0
        %v600 = vadd.f32 %v536, 48.0
        %v601 = vadd.f32 %v537, 48.0
        %v602 = vadd.f32 %v538, 48.0
        %v603 = vmul.f32 %v155, %v539
        %v604 = vmul.f32 %v156, %v540
        %v605 = vmul.f32 %v157, %v541
        %v606 = vmul.f32 %v158, %v542
        %v607 = vmul.f32 %v159, %v543
        %v608 = vmul.f32 %v160, %v544
        %v609 = vmul.f32 %v161, %v545
        %v610 = vmul.f32 %v162, %v546
        %v611 = vmul.f32 %v163, %v547
        %v612 = vmul.f32 %v164, %v548
        %v613 = vmul.f32 %v165, %v549
        %v614 = vmul.f32 %v166, %v550
        %v615 = vmul.f32 %v167, %v551
        %v616 = vmul.f32 %v168, %v552
        %v617 = vmul.f32 %v169, %v553
        %v618 = vmul.f32 %v170, %v554
        %v619 = vmul.f32 %v171, %v555
        %v620 = vmul.f32 %v172, %v556
        %v621 = vmul.f32 %v173, %v557
        %v622 = vmul.f32 %v174, %v558
        %v623 = vmul.f32 %v175, %v559
        %v624 = vmul.f32 %v176, %v560
        %v625 = vmul.f32 %v177, %v561
        %v626 = vmul.f32 %v178, %v562
        %v627 = vmul.f32 %v179, %v563
        %v628 = vmul.f32 %v180, %v564
        %v629 = vmul.f32 %v181, %v565
        %v630 = vmul.f32 %v182, %v566
        %v631 = vmul.f32 %v183, %v567
        %v632 = vmul.f32 %v184, %v568
        %v633 = vmul.f32 %v185, %v569
        %v634 = vmul.f32 %v186, %v570
        %v635 = vmul.f32 %v187, %v571
        %v636 = vmul.f32 %v188, %v572
        %v637 = vmul.f32 %v189, %v573
        %v638 = vmul.f32 %v190, %v574
        %v639 = vmul.f32 %v191, %v575
        %v640 = vmul.f32 %v192, %v576
        %v641 = vmul.f32 %v193, %v577
        %v642 = vmul.f32 %v194, %v578
        %v643 = vmul.f32 %v195, %v579
        %v644 = vmul.f32 %v196, %v580
        %v645 = vmul.f32 %v197, %v581
        %v646 = vmul.f32 %v198, %v582
        %v647 = vmul.f32 %v199, %v583
        %v648 = vmul.f32 %v200, %v584
        %v649 = vmul.f32 %v201, %v585
        %v650 = vmul.f32 %v202, %v586
        %v651 = vmul.f32 %v203, %v587
        %v652 = vmul.f32 %v204, %v588
        %v653 = vmul.f32 %v205, %v589
        %v654 = vmul.f32 %v206, %v590
        %v655 = vmul.f32 %v207, %v591
        %v656 = vmul.f32 %v208, %v592
        %v657 = vmul.f32 %v209, %v593
        %v658 = vmul.f32 %v210, %v594
        %v659 = vmul.f32 %v211, %v595
        %v660 = vmul.f32 %v212, %v596
        %v661 = vmul.f32 %v213, %v597
        %v662 = vmul.f32 %v214, %v598
        %v663 = vmul.f32 %v215, %v599
        %v664 = vmul.f32 %v216, %v600
        %v665 = vmul.f32 %v217, %v601
        %v666 = vmul.f32 %v218, %v602
        %v667 = vadd.f32 %v603, -28.0
        %v668 = vadd.f32 %v604, -28.0
        %v669 = vadd.f32 %v605, -28.0
        %v670 = vadd.f32 %v606, -28.0
        %v671 = vadd.f32 %v607, -28.0
        %v672 = vadd.f32 %v608, -28.0
        %v673 = vadd.f32 %v609, -28.0
        %v674 = vadd.f32 %v610, -28.0
        %v675 = vadd.f32 %v611, -28.0
        %v676 = vadd.f32 %v612, -28.0
        %v677 = vadd.f32 %v613, -28.0
        %v678 = vadd.f32 %v614, -28.0
        %v679 = vadd.f32 %v615, -28.0
        %v680 = vadd.f32 %v616, -28.0
        %v681 = vadd.f32 %v617, -28.0
        %v682 = vadd.f32 %v618, -28.0
        %v683 = vadd.f32 %v619, -28.0
        %v684 = vadd.f32 %v620, -28.0
        %v685 = vadd.f32 %v621, -28.0
        %v686 = vadd.f32 %v622, -28.0
        %v687 = vadd.f32 %v623, -28.0
        %v688 = vadd.f32 %v624, -28.0
        %v689 = vadd.f32 %v625, -28.0
        %v690 = vadd.f32 %v626, -28.0
        %v691 = vadd.f32 %v627, -28.0
        %v692 = vadd.f32 %v628, -28.0
        %v693 = vadd.f32 %v629, -28.0
        %v694 = vadd.f32 %v630, -28.0
        %v695 = vadd.f32 %v631, -28.0
        %v696 = vadd.f32 %v632, -28.0
        %v697 = vadd.f32 %v633, -28.0
        %v698 = vadd.f32 %v634, -28.0
        %v699 = vadd.f32 %v635, -28.0
        %v700 = vadd.f32 %v636, -28.0
        %v701 = vadd.f32 %v637, -28.0
        %v702 = vadd.f32 %v638, -28.0
        %v703 = vadd.f32 %v639, -28.0
        %v704 = vadd.f32 %v640, -28.0
        %v705 = vadd.f32 %v641, -28.0
        %v706 = vadd.f32 %v642, -28.0
        %v707 = vadd.f32 %v643, -28.0
        %v708 = vadd.f32 %v644, -28.0
        %v709 = vadd.f32 %v645, -28.0
        %v710 = vadd.f32 %v646, -28.0
        %v711 = vadd.f32 %v647, -28.0
        %v712 = vadd.f32 %v648, -28.0
        %v713 = vadd.f32 %v649, -28.0
        %v714 = vadd.f32 %v650, -28.0
        %v715 = vadd.f32 %v651, -28.0
        %v716 = vadd.f32 %v652, -28.0
        %v717 = vadd.f32 %v653, -28.0
        %v718 = vadd.f32 %v654, -28.0
        %v719 = vadd.f32 %v655, -28.0
        %v720 = vadd.f32 %v656, -28.0
        %v721 = vadd.f32 %v657, -28.0
        %v722 = vadd.f32 %v658, -28.0
        %v723 = vadd.f32 %v659, -28.0
        %v724 = vadd.f32 %v660, -28.0
        %v725 = vadd.f32 %v661, -28.0
        %v726 = vadd.f32 %v662, -28.0
        %v727 = vadd.f32 %v663, -28.0
        %v728 = vadd.f32 %v664, -28.0
        %v729 = vadd.f32 %v665, -28.0
        %v730 = vadd.f32 %v666, -28.0
        %v731 = vmul.f32 %v155, %v155
        %v732 = vmul.f32 %v156, %v156
        %v733 = vmul.f32 %v157, %v157
        %v734 = vmul.f32 %v158, %v158
        %v735 = vmul.f32 %v159, %v159
        %v736 = vmul.f32 %v160, %v160
        %v737 = vmul.f32 %v161, %v161
        %v738 = vmul.f32 %v162, %v162
        %v739 = vmul.f32 %v163, %v163
        %v740 = vmul.f32 %v164, %v164
        %v741 = vmul.f32 %v165, %v165
        %v742 = vmul.f32 %v166, %v166
        %v743 = vmul.f32 %v167, %v167
        %v744 = vmul.f32 %v168, %v168
        %v745 = vmul.f32 %v169, %v169
        %v746 = vmul.f32 %v170, %v170
        %v747 = vmul.f32 %v171, %v171
        %v748 = vmul.f32 %v172, %v172
        %v749 = vmul.f32 %v173, %v173
        %v750 = vmul.f32 %v174, %v174
        %v751 = vmul.f32 %v175, %v175
        %v752 = vmul.f32 %v176, %v176
        %v753 = vmul.f32 %v177, %v177
        %v754 = vmul.f32 %v178, %v178
        %v755 = vmul.f32 %v179, %v179
        %v756 = vmul.f32 %v180, %v180
        %v757 = vmul.f32 %v181, %v181
        %v758 = vmul.f32 %v182, %v182
        %v759 = vmul.f32 %v183, %v183
        %v760 = vmul.f32 %v184, %v184
        %v761 = vmul.f32 %v185, %v185
        %v762 = vmul.f32 %v186, %v186
        %v763 = vmul.f32 %v187, %v187
        %v764 = vmul.f32 %v188, %v188
        %v765 = vmul.f32 %v189, %v189
        %v766 = vmul.f32 %v190, %v190
        %v767 = vmul.f32 %v191, %v191
        %v768 = vmul.f32 %v192, %v192
        %v769 = vmul.f32 %v193, %v193
        %v770 = vmul.f32 %v194, %v194
        %v771 = vmul.f32 %v195, %v195
        %v772 = vmul.f32 %v196, %v196
        %v773 = vmul.f32 %v197, %v197
        %v774 = vmul.f32 %v198, %v198
        %v775 = vmul.f32 %v199, %v199
        %v776 = vmul.f32 %v200, %v200
        %v777 = vmul.f32 %v201, %v201
        %v778 = vmul.f32 %v202, %v202
        %v779 = vmul.f32 %v203, %v203
        %v780 = vmul.f32 %v204, %v204
        %v781 = vmul.f32 %v205, %v205
        %v782 = vmul.f32 %v206, %v206
        %v783 = vmul.f32 %v207, %v207
        %v784 = vmul.f32 %v208, %v208
        %v785 = vmul.f32 %v209, %v209
        %v786 = vmul.f32 %v210, %v210
        %v787 = vmul.f32 %v211, %v211
        %v788 = vmul.f32 %v212, %v212
        %v789 = vmul.f32 %v213, %v213
        %v790 = vmul.f32 %v214, %v214
        %v791 = vmul.f32 %v215, %v215
        %v792 = vmul.f32 %v216, %v216
        %v793 = vmul.f32 %v217, %v217
        %v794 = vmul.f32 %v218, %v218
        %v795 = vmul.f32 %v731, %v731
        %v796 = vmul.f32 %v732, %v732
        %v797 = vmul.f32 %v733, %v733
        %v798 = vmul.f32 %v734, %v734
        %v799 = vmul.f32 %v735, %v735
        %v800 = vmul.f32 %v736, %v736
        %v801 = vmul.f32 %v737, %v737
        %v802 = vmul.f32 %v738, %v738
        %v803 = vmul.f32 %v739, %v739
        %v804 = vmul.f32 %v740, %v740
        %v805 = vmul.f32 %v741, %v741
        %v806 = vmul.f32 %v742, %v742
        %v807 = vmul.f32 %v743, %v743
        %v808 = vmul.f32 %v744, %v744
        %v809 = vmul.f32 %v745, %v745
        %v810 = vmul.f32 %v746, %v746
        %v811 = vmul.f32 %v747, %v747
        %v812 = vmul.f32 %v748, %v748
        %v813 = vmul.f32 %v749, %v749
        %v814 = vmul.f32 %v750, %v750
        %v815 = vmul.f32 %v751, %v751
        %v816 = vmul.f32 %v752, %v752
        %v817 = vmul.f32 %v753, %v753
        %v818 = vmul.f32 %v754, %v754
        %v819 = vmul.f32 %v755, %v755
        %v820 = vmul.f32 %v756, %v756
        %v821 = vmul.f32 %v757, %v757
        %v822 = vmul.f32 %v758, %v758
        %v823 = vmul.f32 %v759, %v759
        %v824 = vmul.f32 %v760, %v760
        %v825 = vmul.f32 %v761, %v761
        %v826 = vmul.f32 %v762, %v762
        %v827 = vmul.f32 %v763, %v763
        %v828 = vmul.f32 %v764, %v764
        %v829 = vmul.f32 %v765, %v765
        %v830 = vmul.f32 %v766, %v766
        %v831 = vmul.f32 %v767, %v767
        %v832 = vmul.f32 %v768, %v768
        %v833 = vmul.f32 %v769, %v769
        %v834 = vmul.f32 %v770, %v770
        %v835 = vmul.f32 %v771, %v771
        %v836 = vmul.f32 %v772, %v772
        %v837 = vmul.f32 %v773, %v773
        %v838 = vmul.f32 %v774, %v774
        %v839 = vmul.f32 %v775, %v775
        %v840 = vmul.f32 %v776, %v776
        %v841 = vmul.f32 %v777, %v777
        %v842 = vmul.f32 %v778, %v778
        %v843 = vmul.f32 %v779, %v779
        %v844 = vmul.f32 %v780, %v780
        %v845 = vmul.f32 %v781, %v781
        %v846 = vmul.f32 %v782, %v782
        %v847 = vmul.f32 %v783, %v783
        %v848 = vmul.f32 %v784, %v784
        %v849 = vmul.f32 %v785, %v785
        %v850 = vmul.f32 %v786, %v786
        %v851 = vmul.f32 %v787, %v787
        %v852 = vmul.f32 %v788, %v788
        %v853 = vmul.f32 %v789, %v789
        %v854 = vmul.f32 %v790, %v790
        %v855 = vmul.f32 %v791, %v791
        %v856 = vmul.f32 %v792, %v792
        %v857 = vmul.f32 %v793, %v793
        %v858 = vmul.f32 %v794, %v794
        %v859 = vmul.f32 %v155, %v795
        %v860 = vmul.f32 %v156, %v796
        %v861 = vmul.f32 %v157, %v797
        %v862 = vmul.f32 %v158, %v798
        %v863 = vmul.f32 %v159, %v799
        %v864 = vmul.f32 %v160, %v800
        %v865 = vmul.f32 %v161, %v801
        %v866 = vmul.f32 %v162, %v802
        %v867 = vmul.f32 %v163, %v803
        %v868 = vmul.f32 %v164, %v804
        %v869 = vmul.f32 %v165, %v805
        %v870 = vmul.f32 %v166, %v806
        %v871 = vmul.f32 %v167, %v807
        %v872 = vmul.f32 %v168, %v808
        %v873 = vmul.f32 %v169, %v809
        %v874 = vmul.f32 %v170, %v810
        %v875 = vmul.f32 %v171, %v811
        %v876 = vmul.f32 %v172, %v812
        %v877 = vmul.f32 %v173, %v813
        %v878 = vmul.f32 %v174, %v814
        %v879 = vmul.f32 %v175, %v815
        %v880 = vmul.f32 %v176, %v816
        %v881 = vmul.f32 %v177, %v817
        %v882 = vmul.f32 %v178, %v818
        %v883 = vmul.f32 %v179, %v819
        %v884 = vmul.f32 %v180, %v820
        %v885 = vmul.f32 %v181, %v821
        %v886 = vmul.f32 %v182, %v822
        %v887 = vmul.f32 %v183, %v823
        %v888 = vmul.f32 %v184, %v824
        %v889 = vmul.f32 %v185, %v825
        %v890 = vmul.f32 %v186, %v826
        %v891 = vmul.f32 %v187, %v827
        %v892 = vmul.f32 %v188, %v828
        %v893 = vmul.f32 %v189, %v829
        %v894 = vmul.f32 %v190, %v830
        %v895 = vmul.f32 %v191, %v831
        %v896 = vmul.f32 %v192, %v832
        %v897 = vmul.f32 %v193, %v833
        %v898 = vmul.f32 %v194, %v834
        %v899 = vmul.f32 %v195, %v835
        %v900 = vmul.f32 %v196, %v836
        %v901 = vmul.f32 %v197, %v837
        %v902 = vmul.f32 %v198, %v838
        %v903 = vmul.f32 %v199, %v839
        %v904 = vmul.f32 %v200, %v840
        %v905 = vmul.f32 %v201, %v841
        %v906 = vmul.f32 %v202, %v842
        %v907 = vmul.f32 %v203, %v843
        %v908 = vmul.f32 %v204, %v844
        %v909 = vmul.f32 %v205, %v845
        %v910 = vmul.f32 %v206, %v846
        %v911 = vmul.f32 %v207, %v847
        %v912 = vmul.f32 %v208, %v848
        %v913 = vmul.f32 %v209, %v849
        %v914 = vmul.f32 %v210, %v850
        %v915 = vmul.f32 %v211, %v851
        %v916 = vmul.f32 %v212, %v852
        %v917 = vmul.f32 %v213, %v853
        %v918 = vmul.f32 %v214, %v854
        %v919 = vmul.f32 %v215, %v855
        %v920 = vmul.f32 %v216, %v856
        %v921 = vmul.f32 %v217, %v857
        %v922 = vmul.f32 %v218, %v858
        %v923 = vmul.f32 %v859, %v667
        %v924 = vmul.f32 %v860, %v668
        %v925 = vmul.f32 %v861, %v669
        %v926 = vmul.f32 %v862, %v670
        %v927 = vmul.f32 %v863, %v671
        %v928 = vmul.f32 %v864, %v672
        %v929 = vmul.f32 %v865, %v673
        %v930 = vmul.f32 %v866, %v674
        %v931 = vmul.f32 %v867, %v675
        %v932 = vmul.f32 %v868, %v676
        %v933 = vmul.f32 %v869, %v677
        %v934 = vmul.f32 %v870, %v678
        %v935 = vmul.f32 %v871, %v679
        %v936 = vmul.f32 %v872, %v680
        %v937 = vmul.f32 %v873, %v681
        %v938 = vmul.f32 %v874, %v682
        %v939 = vmul.f32 %v875, %v683
        %v940 = vmul.f32 %v876, %v684
        %v941 = vmul.f32 %v877, %v685
        %v942 = vmul.f32 %v878, %v686
        %v943 = vmul.f32 %v879, %v687
        %v944 = vmul.f32 %v880, %v688
        %v945 = vmul.f32 %v881, %v689
        %v946 = vmul.f32 %v882, %v690
        %v947 = vmul.f32 %v883, %v691
        %v948 = vmul.f32 %v884, %v692
        %v949 = vmul.f32 %v885, %v693
        %v950 = vmul.f32 %v886, %v694
        %v951 = vmul.f32 %v887, %v695
        %v952 = vmul.f32 %v888, %v696
        %v953 = vmul.f32 %v889, %v697
        %v954 = vmul.f32 %v890, %v698
        %v955 = vmul.f32 %v891, %v699
        %v956 = vmul.f32 %v892, %v700
        %v957 = vmul.f32 %v893, %v701
        %v958 = vmul.f32 %v894, %v702
        %v959 = vmul.f32 %v895, %v703
        %v960 = vmul.f32 %v896, %v704
        %v961 = vmul.f32 %v897, %v705
        %v962 = vmul.f32 %v898, %v706
        %v963 = vmul.f32 %v899, %v707
        %v964 = vmul.f32 %v900, %v708
        %v965 = vmul.f32 %v901, %v709
        %v966 = vmul.f32 %v902, %v710
        %v967 = vmul.f32 %v903, %v711
        %v968 = vmul.f32 %v904, %v712
        %v969 = vmul.f32 %v905, %v713
        %v970 = vmul.f32 %v906, %v714
        %v971 = vmul.f32 %v907, %v715
        %v972 = vmul.f32 %v908, %v716
        %v973 = vmul.f32 %v909, %v717
        %v974 = vmul.f32 %v910, %v718
        %v975 = vmul.f32 %v911, %v719
        %v976 = vmul.f32 %v912, %v720
        %v977 = vmul.f32 %v913, %v721
        %v978 = vmul.f32 %v914, %v722
        %v979 = vmul.f32 %v915, %v723
        %v980 = vmul.f32 %v916, %v724
        %v981 = vmul.f32 %v917, %v725
        %v982 = vmul.f32 %v918, %v726
        %v983 = vmul.f32 %v919, %v727
        %v984 = vmul.f32 %v920, %v728
        %v985 = vmul.f32 %v921, %v729
        %v986 = vmul.f32 %v922, %v730
        %v987 = vadd.f32 %v411, %v923
        %v988 = vadd.f32 %v412, %v924
        %v989 = vadd.f32 %v413, %v925
        %v990 = vadd.f32 %v414, %v926
        %v991 = vadd.f32 %v415, %v927
        %v992 = vadd.f32 %v416, %v928
        %v993 = vadd.f32 %v417, %v929
        %v994 = vadd.f32 %v418, %v930
        %v995 = vadd.f32 %v419, %v931
        %v996 = vadd.f32 %v420, %v932
        %v997 = vadd.f32 %v421, %v933
        %v998 = vadd.f32 %v422, %v934
        %v999 = vadd.f32 %v423, %v935
        %v1000 = vadd.f32 %v424, %v936
        %v1001 = vadd.f32 %v425, %v937
        %v1002 = vadd.f32 %v426, %v938
        %v1003 = vadd.f32 %v427, %v939
        %v1004 = vadd.f32 %v428, %v940
        %v1005 = vadd.f32 %v429, %v941
        %v1006 = vadd.f32 %v430, %v942
        %v1007 = vadd.f32 %v431, %v943
        %v1008 = vadd.f32 %v432, %v944
        %v1009 = vadd.f32 %v433, %v945
        %v1010 = vadd.f32 %v434, %v946
        %v1011 = vadd.f32 %v435, %v947
        %v1012 = vadd.f32 %v436, %v948
        %v1013 = vadd.f32 %v437, %v949
        %v1014 = vadd.f32 %v438, %v950
        %v1015 = vadd.f32 %v439, %v951
        %v1016 = vadd.f32 %v440, %v952
        %v1017 = vadd.f32 %v441, %v953
        %v1018 = vadd.f32 %v442, %v954
        %v1019 = vadd.f32 %v443, %v955
        %v1020 = vadd.f32 %v444, %v956
        %v1021 = vadd.f32 %v445, %v957
        %v1022 = vadd.f32 %v446, %v958
        %v1023 = vadd.f32 %v447, %v959
        %v1024 = vadd.f32 %v448, %v960
        %v1025 = vadd.f32 %v449, %v961
        %v1026 = vadd.f32 %v450, %v962
        %v1027 = vadd.f32 %v451, %v963
        %v1028 = vadd.f32 %v452, %v964
        %v1029 = vadd.f32 %v453, %v965
        %v1030 = vadd.f32 %v454, %v966
        %v1031 = vadd.f32 %v455, %v967
        %v1032 = vadd.f32 %v456, %v968
        %v1033 = vadd.f32 %v457, %v969
        %v1034 = vadd.f32 %v458, %v970
        %v1035 = vadd.f32 %v459, %v971
        %v1036 = vadd.f32 %v460, %v972
        %v1037 = vadd.f32 %v461, %v973
        %v1038 = vadd.f32 %v462, %v974
        %v1039 = vadd.f32 %v463, %v975
        %v1040 = vadd.f32 %v464, %v976
        %v1041 = vadd.f32 %v465, %v977
        %v1042 = vadd.f32 %v466, %v978
        %v1043 = vadd.f32 %v467, %v979
        %v1044 = vadd.f32 %v468, %v980
        %v1045 = vadd.f32 %v469, %v981
        %v1046 = vadd.f32 %v470, %v982
        %v1047 = vadd.f32 %v471, %v983
        %v1048 = vadd.f32 %v472, %v984
        %v1049 = vadd.f32 %v473, %v985
        %v1050 = vadd.f32 %v474, %v986
        %vm1051 = vcmp.lt.f32.partialorder %v155, 1.0
        %vm1052 = vcmp.lt.f32.partialorder %v156, 1.0
        %vm1053 = vcmp.lt.f32.partialorder %v157, 1.0
        %vm1054 = vcmp.lt.f32.partialorder %v158, 1.0
        %vm1055 = vcmp.lt.f32.partialorder %v159, 1.0
        %vm1056 = vcmp.lt.f32.partialorder %v160, 1.0
        %vm1057 = vcmp.lt.f32.partialorder %v161, 1.0
        %vm1058 = vcmp.lt.f32.partialorder %v162, 1.0
        %vm1059 = vcmp.lt.f32.partialorder %v163, 1.0
        %vm1060 = vcmp.lt.f32.partialorder %v164, 1.0
        %vm1061 = vcmp.lt.f32.partialorder %v165, 1.0
        %vm1062 = vcmp.lt.f32.partialorder %v166, 1.0
        %vm1063 = vcmp.lt.f32.partialorder %v167, 1.0
        %vm1064 = vcmp.lt.f32.partialorder %v168, 1.0
        %vm1065 = vcmp.lt.f32.partialorder %v169, 1.0
        %vm1066 = vcmp.lt.f32.partialorder %v170, 1.0
        %vm1067 = vcmp.lt.f32.partialorder %v171, 1.0
        %vm1068 = vcmp.lt.f32.partialorder %v172, 1.0
        %vm1069 = vcmp.lt.f32.partialorder %v173, 1.0
        %vm1070 = vcmp.lt.f32.partialorder %v174, 1.0
        %vm1071 = vcmp.lt.f32.partialorder %v175, 1.0
        %vm1072 = vcmp.lt.f32.partialorder %v176, 1.0
        %vm1073 = vcmp.lt.f32.partialorder %v177, 1.0
        %vm1074 = vcmp.lt.f32.partialorder %v178, 1.0
        %vm1075 = vcmp.lt.f32.partialorder %v179, 1.0
        %vm1076 = vcmp.lt.f32.partialorder %v180, 1.0
        %vm1077 = vcmp.lt.f32.partialorder %v181, 1.0
        %vm1078 = vcmp.lt.f32.partialorder %v182, 1.0
        %vm1079 = vcmp.lt.f32.partialorder %v183, 1.0
        %vm1080 = vcmp.lt.f32.partialorder %v184, 1.0
        %vm1081 = vcmp.lt.f32.partialorder %v185, 1.0
        %vm1082 = vcmp.lt.f32.partialorder %v186, 1.0
        %vm1083 = vcmp.lt.f32.partialorder %v187, 1.0
        %vm1084 = vcmp.lt.f32.partialorder %v188, 1.0
        %vm1085 = vcmp.lt.f32.partialorder %v189, 1.0
        %vm1086 = vcmp.lt.f32.partialorder %v190, 1.0
        %vm1087 = vcmp.lt.f32.partialorder %v191, 1.0
        %vm1088 = vcmp.lt.f32.partialorder %v192, 1.0
        %vm1089 = vcmp.lt.f32.partialorder %v193, 1.0
        %vm1090 = vcmp.lt.f32.partialorder %v194, 1.0
        %vm1091 = vcmp.lt.f32.partialorder %v195, 1.0
        %vm1092 = vcmp.lt.f32.partialorder %v196, 1.0
        %vm1093 = vcmp.lt.f32.partialorder %v197, 1.0
        %vm1094 = vcmp.lt.f32.partialorder %v198, 1.0
        %vm1095 = vcmp.lt.f32.partialorder %v199, 1.0
        %vm1096 = vcmp.lt.f32.partialorder %v200, 1.0
        %vm1097 = vcmp.lt.f32.partialorder %v201, 1.0
        %vm1098 = vcmp.lt.f32.partialorder %v202, 1.0
        %vm1099 = vcmp.lt.f32.partialorder %v203, 1.0
        %vm1100 = vcmp.lt.f32.partialorder %v204, 1.0
        %vm1101 = vcmp.lt.f32.partialorder %v205, 1.0
        %vm1102 = vcmp.lt.f32.partialorder %v206, 1.0
        %vm1103 = vcmp.lt.f32.partialorder %v207, 1.0
        %vm1104 = vcmp.lt.f32.partialorder %v208, 1.0
        %vm1105 = vcmp.lt.f32.partialorder %v209, 1.0
        %vm1106 = vcmp.lt.f32.partialorder %v210, 1.0
        %vm1107 = vcmp.lt.f32.partialorder %v211, 1.0
        %vm1108 = vcmp.lt.f32.partialorder %v212, 1.0
        %vm1109 = vcmp.lt.f32.partialorder %v213, 1.0
        %vm1110 = vcmp.lt.f32.partialorder %v214, 1.0
        %vm1111 = vcmp.lt.f32.partialorder %v215, 1.0
        %vm1112 = vcmp.lt.f32.partialorder %v216, 1.0
        %vm1113 = vcmp.lt.f32.partialorder %v217, 1.0
        %vm1114 = vcmp.lt.f32.partialorder %v218, 1.0
        %v1115 = vsel %vm1051, %v987, 0.0
        %v1116 = vsel %vm1052, %v988, 0.0
        %v1117 = vsel %vm1053, %v989, 0.0
        %v1118 = vsel %vm1054, %v990, 0.0
        %v1119 = vsel %vm1055, %v991, 0.0
        %v1120 = vsel %vm1056, %v992, 0.0
        %v1121 = vsel %vm1057, %v993, 0.0
        %v1122 = vsel %vm1058, %v994, 0.0
        %v1123 = vsel %vm1059, %v995, 0.0
        %v1124 = vsel %vm1060, %v996, 0.0
        %v1125 = vsel %vm1061, %v997, 0.0
        %v1126 = vsel %vm1062, %v998, 0.0
        %v1127 = vsel %vm1063, %v999, 0.0
        %v1128 = vsel %vm1064, %v1000, 0.0
        %v1129 = vsel %vm1065, %v1001, 0.0
        %v1130 = vsel %vm1066, %v1002, 0.0
        %v1131 = vsel %vm1067, %v1003, 0.0
        %v1132 = vsel %vm1068, %v1004, 0.0
        %v1133 = vsel %vm1069, %v1005, 0.0
        %v1134 = vsel %vm1070, %v1006, 0.0
        %v1135 = vsel %vm1071, %v1007, 0.0
        %v1136 = vsel %vm1072, %v1008, 0.0
        %v1137 = vsel %vm1073, %v1009, 0.0
        %v1138 = vsel %vm1074, %v1010, 0.0
        %v1139 = vsel %vm1075, %v1011, 0.0
        %v1140 = vsel %vm1076, %v1012, 0.0
        %v1141 = vsel %vm1077, %v1013, 0.0
        %v1142 = vsel %vm1078, %v1014, 0.0
        %v1143 = vsel %vm1079, %v1015, 0.0
        %v1144 = vsel %vm1080, %v1016, 0.0
        %v1145 = vsel %vm1081, %v1017, 0.0
        %v1146 = vsel %vm1082, %v1018, 0.0
        %v1147 = vsel %vm1083, %v1019, 0.0
        %v1148 = vsel %vm1084, %v1020, 0.0
        %v1149 = vsel %vm1085, %v1021, 0.0
        %v1150 = vsel %vm1086, %v1022, 0.0
        %v1151 = vsel %vm1087, %v1023, 0.0
        %v1152 = vsel %vm1088, %v1024, 0.0
        %v1153 = vsel %vm1089, %v1025, 0.0
        %v1154 = vsel %vm1090, %v1026, 0.0
        %v1155 = vsel %vm1091, %v1027, 0.0
        %v1156 = vsel %vm1092, %v1028, 0.0
        %v1157 = vsel %vm1093, %v1029, 0.0
        %v1158 = vsel %vm1094, %v1030, 0.0
        %v1159 = vsel %vm1095, %v1031, 0.0
        %v1160 = vsel %vm1096, %v1032, 0.0
        %v1161 = vsel %vm1097, %v1033, 0.0
        %v1162 = vsel %vm1098, %v1034, 0.0
        %v1163 = vsel %vm1099, %v1035, 0.0
        %v1164 = vsel %vm1100, %v1036, 0.0
        %v1165 = vsel %vm1101, %v1037, 0.0
        %v1166 = vsel %vm1102, %v1038, 0.0
        %v1167 = vsel %vm1103, %v1039, 0.0
        %v1168 = vsel %vm1104, %v1040, 0.0
        %v1169 = vsel %vm1105, %v1041, 0.0
        %v1170 = vsel %vm1106, %v1042, 0.0
        %v1171 = vsel %vm1107, %v1043, 0.0
        %v1172 = vsel %vm1108, %v1044, 0.0
        %v1173 = vsel %vm1109, %v1045, 0.0
        %v1174 = vsel %vm1110, %v1046, 0.0
        %v1175 = vsel %vm1111, %v1047, 0.0
        %v1176 = vsel %vm1112, %v1048, 0.0
        %v1177 = vsel %vm1113, %v1049, 0.0
        %v1178 = vsel %vm1114, %v1050, 0.0
        %1179 = vst [vmem:[%s142] sm:$0xff] %v1115
        %1180 = vst [vmem:[%s142 + $0x8] sm:$0xff] %v1116
        %1181 = vst [vmem:[%s142 + $0x10] sm:$0xff] %v1117
        %1182 = vst [vmem:[%s142 + $0x18] sm:$0xff] %v1118
        %1183 = vst [vmem:[%s142 + $0x20] sm:$0xff] %v1119
        %1184 = vst [vmem:[%s142 + $0x28] sm:$0xff] %v1120
        %1185 = vst [vmem:[%s142 + $0x30] sm:$0xff] %v1121
        %vm1186 = vcmask 850944
        %1187 = vst.msk [vmem:[%s142 + $0x38] sm:$0xff] %vm1186, %v1122
        %1188 = vst [vmem:[%s142 + $0x40] sm:$0xff] %v1123
        %1189 = vst [vmem:[%s142 + $0x48] sm:$0xff] %v1124
        %1190 = vst [vmem:[%s142 + $0x50] sm:$0xff] %v1125
        %1191 = vst [vmem:[%s142 + $0x58] sm:$0xff] %v1126
        %1192 = vst [vmem:[%s142 + $0x60] sm:$0xff] %v1127
        %1193 = vst [vmem:[%s142 + $0x68] sm:$0xff] %v1128
        %1194 = vst [vmem:[%s142 + $0x70] sm:$0xff] %v1129
        %1195 = vst.msk [vmem:[%s142 + $0x78] sm:$0xff] %vm1186, %v1130
        %1196 = vst [vmem:[%s142 + $0x80] sm:$0xff] %v1131
        %1197 = vst [vmem:[%s142 + $0x88] sm:$0xff] %v1132
        %1198 = vst [vmem:[%s142 + $0x90] sm:$0xff] %v1133
        %1199 = vst [vmem:[%s142 + $0x98] sm:$0xff] %v1134
        %1200 = vst [vmem:[%s142 + $0xa0] sm:$0xff] %v1135
        %1201 = vst [vmem:[%s142 + $0xa8] sm:$0xff] %v1136
        %1202 = vst [vmem:[%s142 + $0xb0] sm:$0xff] %v1137
        %1203 = vst.msk [vmem:[%s142 + $0xb8] sm:$0xff] %vm1186, %v1138
        %1204 = vst [vmem:[%s142 + $0xc0] sm:$0xff] %v1139
        %1205 = vst [vmem:[%s142 + $0xc8] sm:$0xff] %v1140
        %1206 = vst [vmem:[%s142 + $0xd0] sm:$0xff] %v1141
        %1207 = vst [vmem:[%s142 + $0xd8] sm:$0xff] %v1142
        %1208 = vst [vmem:[%s142 + $0xe0] sm:$0xff] %v1143
        %1209 = vst [vmem:[%s142 + $0xe8] sm:$0xff] %v1144
        %1210 = vst [vmem:[%s142 + $0xf0] sm:$0xff] %v1145
        %1211 = vst.msk [vmem:[%s142 + $0xf8] sm:$0xff] %vm1186, %v1146
        %1212 = vst [vmem:[%s142 + $0x100] sm:$0xff] %v1147
        %1213 = vst [vmem:[%s142 + $0x108] sm:$0xff] %v1148
        %1214 = vst [vmem:[%s142 + $0x110] sm:$0xff] %v1149
        %1215 = vst [vmem:[%s142 + $0x118] sm:$0xff] %v1150
        %1216 = vst [vmem:[%s142 + $0x120] sm:$0xff] %v1151
        %1217 = vst [vmem:[%s142 + $0x128] sm:$0xff] %v1152
        %1218 = vst [vmem:[%s142 + $0x130] sm:$0xff] %v1153
        %1219 = vst.msk [vmem:[%s142 + $0x138] sm:$0xff] %vm1186, %v1154
        %1220 = vst [vmem:[%s142 + $0x140] sm:$0xff] %v1155
        %1221 = vst [vmem:[%s142 + $0x148] sm:$0xff] %v1156
        %1222 = vst [vmem:[%s142 + $0x150] sm:$0xff] %v1157
        %1223 = vst [vmem:[%s142 + $0x158] sm:$0xff] %v1158
        %1224 = vst [vmem:[%s142 + $0x160] sm:$0xff] %v1159
        %1225 = vst [vmem:[%s142 + $0x168] sm:$0xff] %v1160
        %1226 = vst [vmem:[%s142 + $0x170] sm:$0xff] %v1161
        %1227 = vst.msk [vmem:[%s142 + $0x178] sm:$0xff] %vm1186, %v1162
        %1228 = vst [vmem:[%s142 + $0x180] sm:$0xff] %v1163
        %1229 = vst [vmem:[%s142 + $0x188] sm:$0xff] %v1164
        %1230 = vst [vmem:[%s142 + $0x190] sm:$0xff] %v1165
        %1231 = vst [vmem:[%s142 + $0x198] sm:$0xff] %v1166
        %1232 = vst [vmem:[%s142 + $0x1a0] sm:$0xff] %v1167
        %1233 = vst [vmem:[%s142 + $0x1a8] sm:$0xff] %v1168
        %1234 = vst [vmem:[%s142 + $0x1b0] sm:$0xff] %v1169
        %1235 = vst.msk [vmem:[%s142 + $0x1b8] sm:$0xff] %vm1186, %v1170
        %1236 = vst [vmem:[%s142 + $0x1c0] sm:$0xff] %v1171
        %1237 = vst [vmem:[%s142 + $0x1c8] sm:$0xff] %v1172
        %1238 = vst [vmem:[%s142 + $0x1d0] sm:$0xff] %v1173
        %1239 = vst [vmem:[%s142 + $0x1d8] sm:$0xff] %v1174
        %1240 = vst [vmem:[%s142 + $0x1e0] sm:$0xff] %v1175
        %1241 = vst [vmem:[%s142 + $0x1e8] sm:$0xff] %v1176
        %1242 = vst [vmem:[%s142 + $0x1f0] sm:$0xff] %v1177
        %1243 = vst.msk [vmem:[%s142 + $0x1f8] sm:$0xff] %vm1186, %v1178
        %s1244 = sand.u32 %s52, 1
        %s1245 = scalar_lea.sflag [#allocation4], %s1244
        %s1246 = sand.u32 %s52, 1
        %s1247 = smul.addr %s1246, 512
        %s1248 = scalar_lea.vmem [#allocation5], %s1247
        // Predicated region
        $region29: #{tpu_custom_call.1} parent=23 // pred_check
          %p1249 = pneg %p62
        $region30: #{tpu_custom_call.1} parent=23 // pred_check_branch
          %1251 = sbr.rel (%p1249) target = $region32
        $region31: #{tpu_custom_call.1} parent=23 // pred_region
          %s1252 = smul.u32 8, %s18
          %s1253 = ssub.s32 75, %s1252
          %p1254 = scmp.lt.s32.totalorder %s1253, 8
          %s1255 = scalar_select %p1254, %s1253, 8
          %s1256 = smul.u32 128, %s1255
          %s1257 = smul.u32 %s1256, 8
          %s1259 = ssub.s32 8192, %s1257
          %1260 = vsyncadd %s1245, %s1259
          %p1261 = scmp.ne.s32.totalorder 0, %s1257
          %s1262 = smul.addr %s1252, 8
          %s1263 = smul.addr %s1262, 128
          %s1264 = scalar_lea.hbm %s1, %s1263
          %s1265 = smul.u32 64, %s1255
          %s1266 = sshll.u32 %s1248, 4
          %s1267 = int_to_ptr.vmem [resolvable:$true] %s1266
          %s1268 = sshll.u32 %s1265, 4
          %1272 = dma.vmem_to_hbm [thread:$0]  (%p1261), %s1267, %s1268, %s1264, %s1245, 1024, 1024, 64
        $region32: #{tpu_custom_call.1} parent=23 // pred_fallthru
          _
      $region24: #{tpu_custom_call.1} parent=5 // pred_fallthru
        _
      %p1273 = scmp.le.s32.totalorder 2, %s13
      // Predicated region
      $region33: #{tpu_custom_call.1} parent=5 // pred_check
        %p1274 = pneg %p1273
      $region34: #{tpu_custom_call.1} parent=5 // pred_check_branch
        %1276 = sbr.rel (%p1274) target = $region36
      $region35: #{tpu_custom_call.1} parent=5 // pred_region
        %s1277 = ssub.s32 %s13, 2
        // Predicated region
        $region37: #{tpu_custom_call.1} parent=35 // pred_check
          %p1278 = pneg %p68
        $region38: #{tpu_custom_call.1} parent=35 // pred_check_branch
          %1280 = sbr.rel (%p1278) target = $region40
        $region39: #{tpu_custom_call.1} parent=35 // pred_region
          %s1281 = sand.u32 %s53, 1
          %s1282 = scalar_lea.sflag [#allocation4], %s1281
          %s1283 = sand.u32 %s53, 1
          %s1284 = smul.addr %s1283, 512
          %s1285 = scalar_lea.vmem [#allocation5], %s1284
          %1286 = dma.done %s1282, 8192
        $region40: #{tpu_custom_call.1} parent=35 // pred_fallthru
          _
      $region36: #{tpu_custom_call.1} parent=5 // pred_fallthru
        _
    $region6: #{tpu_custom_call.1} parent=1 // loop_footer
      %s17 = sadd.s32 1, %s13
    $region7: #{tpu_custom_call.1} parent=1 // loop_footer_branch
      %12 = sbr.rel target = $region3
    $region8: #{tpu_custom_call.1} parent=1 // loop_exit
      _
    %1287 = vsyncpa [#allocation3], 1
    %s1288 = scalar_lea.sflag [#allocation3], 1
    %1289 = vsyncpa %s1288, 1
    %1290 = vsyncpa [#allocation4], 1
    %s1291 = scalar_lea.sflag [#allocation4], 1
    %1292 = vsyncpa %s1291, 1

</llo_original>
